<compile_context>
chip_gen: v7x
topology: tpu7x:2x2x1
jax: 0.10.0
libtpu: 0.0.40
codegen_flags: <defaults>
</compile_context>

<pallas_src>
import functools

import jax
import jax.numpy as jnp
from jax.experimental import pallas as pl
from jax.experimental.pallas import tpu as pltpu


def _classifier_kernel(*refs, apply_dropout):
    """Dropout (mask mult) -> Linear -> Softmax on one (TM, E) row tile.

    refs (apply_dropout=True):  x, mask, w_t, bias, logits_out, probs_out
    refs (apply_dropout=False): x,       w_t, bias, logits_out, probs_out
      x      : (TM, E)      input dtype (f32 or bf16)
      mask   : (TM, E)      input dtype, already scaled by 1/keep_prob
      w_t    : (E, L_pad)   input dtype (Linear weight, transposed + padded)
      bias   : (1, L_pad)   f32 (padded entries = -1e30)
      outs   : (TM, L_pad)  input dtype
    """
    if apply_dropout:
        x_ref, mask_ref, w_ref, b_ref, logits_ref, probs_ref = refs
    else:
        x_ref, w_ref, b_ref, logits_ref, probs_ref = refs

    x = x_ref[...]
    if apply_dropout:
        x = x * mask_ref[...]          # single multiply; 1/keep_prob pre-folded

    # ---- Linear: (TM, E) @ (E, L_pad) on the MXU, f32 accumulation ----
    logits = jnp.dot(x, w_ref[...], preferred_element_type=jnp.float32)
    logits = logits + b_ref[...]       # bias is f32, broadcast over rows
    logits_ref[...] = logits.astype(logits_ref.dtype)

    # ---- Numerically stable softmax over the (padded) label dim, in f32 ----
    m = jnp.max(logits, axis=-1, keepdims=True)
    e = jnp.exp(logits - m)
    s = jnp.sum(e, axis=-1, keepdims=True)
    probs_ref[...] = (e * pl.reciprocal(s, approx=True)).astype(probs_ref.dtype)


def _choose_tile_rows(n_rows, e_dim, l_pad, itemsize, with_mask):
    """Pick a row tile that keeps double-buffered tiles well inside VMEM
    on every TPU generation (v5e 16 MiB scoped default is the binding one)."""
    per_row_bytes = (e_dim * (2 if with_mask else 1) + 2 * l_pad) * itemsize
    budget = 16 * 1024 * 1024
    tm = budget // (2 * per_row_bytes)           # 2x for double buffering
    tm = max(8, min(1024, (tm // 8) * 8))        # multiple of 8 sublanes
    if n_rows <= tm:
        return n_rows                            # single full-extent block
    return tm


def classifier_forward(x, weight, bias, *, dropout_p=0.0, training=False,
                       rng_key=None):
    """(logits, probs) = Classifier.forward(x); each shaped (..., num_labels).

    x      : (..., E)  float32 or bfloat16
    weight : (L, E)    PyTorch nn.Linear layout
    bias   : (L,)
    """
    E = x.shape[-1]
    L = weight.shape[0]
    lead = x.shape[:-1]
    n_rows = 1
    for d in lead:
        n_rows *= d

    dtype = x.dtype
    x2 = x.reshape(n_rows, E)

    # Lane-dense label dim: pad L up to a multiple of 128 (min 128).
    L_pad = max(128, ((L + 127) // 128) * 128)
    w_t = jnp.zeros((E, L_pad), dtype=dtype).at[:, :L].set(weight.T.astype(dtype))
    b_pad = jnp.full((1, L_pad), -1e30, dtype=jnp.float32)
    b_pad = b_pad.at[0, :L].set(bias.astype(jnp.float32))

    apply_dropout = bool(training) and float(dropout_p) > 0.0
    inputs = [x2]
    if apply_dropout:
        if rng_key is None:
            rng_key = jax.random.PRNGKey(0)
        keep_prob = 1.0 - float(dropout_p)
        keep = jax.random.bernoulli(rng_key, keep_prob, (n_rows, E))
        mask = (keep.astype(jnp.float32) / keep_prob).astype(dtype)
        inputs.append(mask)
    inputs += [w_t, b_pad]

    TM = _choose_tile_rows(n_rows, E, L_pad, jnp.dtype(dtype).itemsize,
                           apply_dropout)
    grid = (pl.cdiv(n_rows, TM),)

    row_spec = pl.BlockSpec((TM, E), lambda i: (i, 0))
    in_specs = [row_spec]
    if apply_dropout:
        in_specs.append(pl.BlockSpec((TM, E), lambda i: (i, 0)))
    in_specs += [
        pl.BlockSpec((E, L_pad), lambda i: (0, 0)),   # weight: VMEM resident
        pl.BlockSpec((1, L_pad), lambda i: (0, 0)),   # bias:   VMEM resident
    ]
    out_specs = (pl.BlockSpec((TM, L_pad), lambda i: (i, 0)),
                 pl.BlockSpec((TM, L_pad), lambda i: (i, 0)))

    kernel = functools.partial(_classifier_kernel, apply_dropout=apply_dropout)

    logits2, probs2 = pl.pallas_call(
        kernel,
        grid=grid,
        in_specs=in_specs,
        out_specs=out_specs,
        out_shape=(jax.ShapeDtypeStruct((n_rows, L_pad), dtype),
                   jax.ShapeDtypeStruct((n_rows, L_pad), dtype)),
        compiler_params=pltpu.CompilerParams(
            dimension_semantics=("parallel",),
            vmem_limit_bytes=32 * 1024 * 1024,
        ),
    )(*inputs)

    logits = logits2[:, :L].reshape(*lead, L)
    probs = probs2[:, :L].reshape(*lead, L)
    return logits, probs


if __name__ == "__main__":
    # Small shapes consistent with the module: batch=2, seq=8, embedding_dim=32,
    # num_labels=4, dropout=0.1.
    batch, seq, embedding_dim, num_labels = 2, 8, 32, 4
    dropout_p = 0.1

    key = jax.random.PRNGKey(0)
    kx, kw, kb, kd = jax.random.split(key, 4)

    x = jax.random.normal(kx, (batch, seq, embedding_dim), dtype=jnp.float32)
    bound = 1.0 / (embedding_dim ** 0.5)
    weight = jax.random.uniform(kw, (num_labels, embedding_dim),
                                minval=-bound, maxval=bound, dtype=jnp.float32)
    bias = jax.random.uniform(kb, (num_labels,),
                              minval=-bound, maxval=bound, dtype=jnp.float32)

    # ---- Eval mode (dropout = identity): check against pure-JAX reference ----
    logits, probs = classifier_forward(x, weight, bias,
                                       dropout_p=dropout_p, training=False)
    jax.block_until_ready((logits, probs))

    ref_logits = x @ weight.T + bias
    ref_probs = jax.nn.softmax(ref_logits, axis=-1)
    assert logits.shape == (batch, seq, num_labels)
    assert probs.shape == (batch, seq, num_labels)
    assert jnp.allclose(logits, ref_logits, atol=1e-5, rtol=1e-5)
    # softmax uses the approximate EUP reciprocal -> looser tolerance
    assert jnp.allclose(probs, ref_probs, atol=1e-2)
    assert jnp.allclose(jnp.sum(probs, axis=-1), 1.0, atol=2e-2)

    # ---- Training mode (dropout active): same mask reproduced for the ref ----
    logits_tr, probs_tr = classifier_forward(x, weight, bias,
                                             dropout_p=dropout_p, training=True,
                                             rng_key=kd)
    jax.block_until_ready((logits_tr, probs_tr))

    keep_prob = 1.0 - dropout_p
    keep = jax.random.bernoulli(kd, keep_prob, (batch * seq, embedding_dim))
    mask = (keep.astype(jnp.float32) / keep_prob).reshape(x.shape)
    ref_logits_tr = (x * mask) @ weight.T + bias
    ref_probs_tr = jax.nn.softmax(ref_logits_tr, axis=-1)
    assert jnp.allclose(logits_tr, ref_logits_tr, atol=1e-5, rtol=1e-5)
    assert jnp.allclose(probs_tr, ref_probs_tr, atol=1e-2)

    # ---- bf16 operand path (v6e/v7x MXU-friendly), eval mode ----
    logits_bf, probs_bf = classifier_forward(x.astype(jnp.bfloat16), weight, bias,
                                             dropout_p=dropout_p, training=False)
    jax.block_until_ready((logits_bf, probs_bf))
    assert jnp.allclose(logits_bf.astype(jnp.float32), ref_logits,
                        atol=5e-2, rtol=5e-2)

    print("KERNEL_OK")
</pallas_src>

<mosaic_0001>
module attributes {stable_mosaic.version = 11 : i64} {
  func.func @_classifier_kernel(%arg0: i32, %arg1: memref<16x32xf32, #tpu.memory_space<vmem>>, %arg2: memref<32x128xf32, #tpu.memory_space<vmem>>, %arg3: memref<1x128xf32, #tpu.memory_space<vmem>>, %arg4: memref<16x128xf32, #tpu.memory_space<vmem>>, %arg5: memref<16x128xf32, #tpu.memory_space<vmem>>) attributes {dimension_semantics = [#tpu.dimension_semantics<parallel>], iteration_bounds = array<i64: 1>, scalar_prefetch = 0 : i64, scratch_operands = 0 : i64, tpu.core_type = #tpu.core_type<tc>, window_params = [{transform_indices = @transform_0, window_bounds = array<i64: 16, 32>}, {pipeline_mode = #tpu.pipeline_mode<synchronous>, transform_indices = @transform_1, window_bounds = array<i64: 32, 128>}, {pipeline_mode = #tpu.pipeline_mode<synchronous>, transform_indices = @transform_2, window_bounds = array<i64: 1, 128>}, {transform_indices = @transform_3, window_bounds = array<i64: 16, 128>}, {transform_indices = @transform_4, window_bounds = array<i64: 16, 128>}]} {
    %c0 = arith.constant 0 : index
    %c0_0 = arith.constant 0 : index
    %0 = vector.load %arg1[%c0, %c0_0] : memref<16x32xf32, #tpu.memory_space<vmem>>, vector<16x32xf32>
    %c0_1 = arith.constant 0 : index
    %c0_2 = arith.constant 0 : index
    %1 = vector.load %arg2[%c0_1, %c0_2] : memref<32x128xf32, #tpu.memory_space<vmem>>, vector<32x128xf32>
    %cst = arith.constant dense<0.000000e+00> : vector<16x128xf32>
    %2 = tpu.matmul %0, %1, %cst {dimension_numbers = #tpu.dot_dimension_numbers<[1], [0], [0], [1], [0, 0, 1, 1], [], []>} : vector<16x32xf32>, vector<32x128xf32>, vector<16x128xf32> -> vector<16x128xf32>
    %c0_3 = arith.constant 0 : index
    %c0_4 = arith.constant 0 : index
    %3 = vector.load %arg3[%c0_3, %c0_4] : memref<1x128xf32, #tpu.memory_space<vmem>>, vector<1x128xf32>
    %4 = vector.broadcast %3 : vector<1x128xf32> to vector<16x128xf32>
    %5 = arith.addf %2, %4 : vector<16x128xf32>
    %c0_5 = arith.constant 0 : index
    %c0_6 = arith.constant 0 : index
    %6 = vector.load %arg4[%c0_5, %c0_6] : memref<16x128xf32, #tpu.memory_space<vmem>>, vector<16x128xf32>
    tpu.vector_store %arg4[%c0_5, %c0_6], %5 {strides = array<i32>} : memref<16x128xf32, #tpu.memory_space<vmem>>, vector<16x128xf32>,
    %cst_7 = arith.constant dense<0xFF800000> : vector<16xf32>
    %7 = vector.multi_reduction <maximumf>, %5, %cst_7 [1] : vector<16x128xf32> to vector<16xf32>
    %8 = vector.shape_cast %7 : vector<16xf32> to vector<16x1xf32>
    %9 = vector.broadcast %8 : vector<16x1xf32> to vector<16x128xf32>
    %10 = arith.subf %5, %9 : vector<16x128xf32>
    %11 = math.exp %10 : vector<16x128xf32>
    %cst_8 = arith.constant dense<0.000000e+00> : vector<16xf32>
    %12 = vector.multi_reduction <add>, %11, %cst_8 [1] : vector<16x128xf32> to vector<16xf32>
    %13 = vector.shape_cast %12 : vector<16xf32> to vector<16x1xf32>
    %14 = tpu.reciprocal %13 {approx = true} : vector<16x1xf32> -> vector<16x1xf32>
    %15 = vector.broadcast %14 : vector<16x1xf32> to vector<16x128xf32>
    %16 = arith.mulf %11, %15 : vector<16x128xf32>
    %c0_9 = arith.constant 0 : index
    %c0_10 = arith.constant 0 : index
    %17 = vector.load %arg5[%c0_9, %c0_10] : memref<16x128xf32, #tpu.memory_space<vmem>>, vector<16x128xf32>
    tpu.vector_store %arg5[%c0_9, %c0_10], %16 {strides = array<i32>} : memref<16x128xf32, #tpu.memory_space<vmem>>, vector<16x128xf32>,
    return
  }
  func.func @transform_0(%arg0: i32) -> (i32, i32) {
    %c0_i32 = arith.constant 0 : i32
    %c0_i32_0 = arith.constant 0 : i32
    return %arg0, %c0_i32 : i32, i32
  }
  func.func @transform_1(%arg0: i32) -> (i32, i32) {
    %c0_i32 = arith.constant 0 : i32
    %c0_i32_0 = arith.constant 0 : i32
    %c0_i32_1 = arith.constant 0 : i32
    return %c0_i32, %c0_i32_0 : i32, i32
  }
  func.func @transform_2(%arg0: i32) -> (i32, i32) {
    %c0_i32 = arith.constant 0 : i32
    %c0_i32_0 = arith.constant 0 : i32
    %c0_i32_1 = arith.constant 0 : i32
    return %c0_i32, %c0_i32_0 : i32, i32
  }
  func.func @transform_3(%arg0: i32) -> (i32, i32) {
    %c0_i32 = arith.constant 0 : i32
    %c0_i32_0 = arith.constant 0 : i32
    return %arg0, %c0_i32 : i32, i32
  }
  func.func @transform_4(%arg0: i32) -> (i32, i32) {
    %c0_i32 = arith.constant 0 : i32
    %c0_i32_0 = arith.constant 0 : i32
    return %arg0, %c0_i32 : i32, i32
  }
}

</mosaic_0001>

<llo_original>
// kernel: tpu_custom_call.1
$region0: #{tpu_custom_call.1}
  #allocation0 [shape = 'u32[]', space=smem, size = 0x4, offset = 0x4, fixed_abs, tag = 'smem constant byte address 0x4 - core index']
  #allocation1 [shape = 'u32[144,128]{1,0:T(1,128)}', space=vmem, size = 0x12000, scoped, tag = 'internal scratch']
  %s0 = inlined_call_operand.hbm [shape: f32[16,32], index: 0, kind: input, shape index: {}]
  %s1 = inlined_call_operand.hbm [shape: f32[32,128], index: 1, kind: input, shape index: {}]
  %s2 = inlined_call_operand.vmem [shape: f32[1,128], index: 2, kind: input, shape index: {}]
  %s3 = inlined_call_operand.hbm [shape: f32[16,128], index: 3, kind: output, shape index: {0}]
  %s4 = inlined_call_operand.hbm [shape: f32[16,128], index: 4, kind: output, shape index: {1}]
  %5 = xla_tuple %s3, %s4
  %s6 = sld [smem:[#allocation0]]
  $region38: #{tpu_custom_call.1} parent=0
    _
  %s8 = ssub.s32 1, %s6
  %s9 = scalar_select 0, %s8, %s6
  $region1: #{tpu_custom_call.1} parent=0
    #allocation2 [shape = 'u8[8192]{0}', space=vmem, size = 0x2000, scoped, tag = 'input window, operand 0, single buffered']
    #allocation3 [shape = 's32[1]{0}', space=sflag, size = 0x4, scoped, tag = 'scoped memory for tpu_custom_call.1']
    #allocation4 [shape = 's32[1]{0}', space=sflag, size = 0x4, scoped, tag = 'scoped memory for tpu_custom_call.1']
    #allocation5 [shape = 'u8[16384]{0}', space=vmem, size = 0x4000, scoped, tag = 'input window, operand 1, single buffered']
    #allocation6 [shape = 's32[1]{0}', space=sflag, size = 0x4, scoped, tag = 'scoped memory for tpu_custom_call.1']
    #allocation7 [shape = 'u8[8192]{0}', space=vmem, size = 0x2000, scoped, tag = 'output window, operand 0, single buffered']
    #allocation8 [shape = 'u8[8192]{0}', space=vmem, size = 0x2000, scoped, tag = 'output window, operand 1, single buffered']
    #allocation9 [shape = 's32[1]{0}', space=sflag, size = 0x4, scoped, tag = 'scoped memory for tpu_custom_call.1']
    %10 = vsyncpa [#allocation3], 0
    %11 = vsyncpa [#allocation6], 0
    %12 = vsyncpa [#allocation4], 0
    %13 = vsyncpa [#allocation9], 0
    // Predicated region
    $region2: #{tpu_custom_call.1} parent=1 // pred_check
      _
    $region3: #{tpu_custom_call.1} parent=1 // pred_check_branch
      %15 = sbr.rel (0) target = $region5
    $region4: #{tpu_custom_call.1} parent=1 // pred_region
      %s17 = ssub.s32 256, 256
      %18 = vsyncadd [#allocation3], %s17
      %s19 = sshll.u32 [#allocation2], 4
      %s20 = int_to_ptr.vmem [resolvable:$true] %s19
      %25 = dma.hbm_to_vmem [thread:$0]  %s0, 256, %s20, [#allocation3], 128, 128, 8
    $region5: #{tpu_custom_call.1} parent=1 // pred_fallthru
      _
    // Predicated region
    $region6: #{tpu_custom_call.1} parent=1 // pred_check
      _
    $region7: #{tpu_custom_call.1} parent=1 // pred_check_branch
      %27 = sbr.rel (0) target = $region9
    $region8: #{tpu_custom_call.1} parent=1 // pred_region
      %s29 = ssub.s32 512, 512
      %30 = vsyncadd [#allocation6], %s29
      %s31 = sshll.u32 [#allocation5], 4
      %s32 = int_to_ptr.vmem [resolvable:$true] %s31
      %37 = dma.hbm_to_vmem [thread:$0]  %s1, 512, %s32, [#allocation6], 128, 128, 8
    $region9: #{tpu_custom_call.1} parent=1 // pred_fallthru
      _
    // Predicated region
    $region10: #{tpu_custom_call.1} parent=1 // pred_check
      _
    $region11: #{tpu_custom_call.1} parent=1 // pred_check_branch
      %39 = sbr.rel (0) target = $region13
    $region12: #{tpu_custom_call.1} parent=1 // pred_region
      _
    $region13: #{tpu_custom_call.1} parent=1 // pred_fallthru
      _
    // Predicated region
    $region14: #{tpu_custom_call.1} parent=1 // pred_check
      _
    $region15: #{tpu_custom_call.1} parent=1 // pred_check_branch
      %41 = sbr.rel (0) target = $region17
    $region16: #{tpu_custom_call.1} parent=1 // pred_region
      %42 = dma.done [#allocation3], 256
    $region17: #{tpu_custom_call.1} parent=1 // pred_fallthru
      _
    // Predicated region
    $region18: #{tpu_custom_call.1} parent=1 // pred_check
      _
    $region19: #{tpu_custom_call.1} parent=1 // pred_check_branch
      %44 = sbr.rel (0) target = $region21
    $region20: #{tpu_custom_call.1} parent=1 // pred_region
      %45 = dma.done [#allocation6], 512
    $region21: #{tpu_custom_call.1} parent=1 // pred_fallthru
      _
    %v46 = vld [vmem:[#allocation2] sm:$0xff]
    %v47 = vld [vmem:[#allocation2 + $0x8] sm:$0xff]
    %v48 = vld [vmem:[#allocation5] sm:$0xff]
    %v49 = vld [vmem:[#allocation5 + $0x8] sm:$0xff]
    %v50 = vld [vmem:[#allocation5 + $0x10] sm:$0xff]
    %v51 = vld [vmem:[#allocation5 + $0x18] sm:$0xff]
    %v52 = vld [vmem:[%s2] sm:$0x1]
    %v54 = vlaneseq
    %v55 = vshrl.u32 %v54, 7
    %v56 = vsub.s32 0, %v55
    %v57 = vrot.slane %v52, %v56
    %vm59 = vcmask 261120
    %v61 = vsel %vm59, %v46, 0
    %v64 = vsel %vm59, %v47, 0
    %66 = vmatprep.subr.mxu0 0.0
    %67 = vmatpush1.msra.mxu0 %v48
    %68 = vmatprep.subr.mxu0 0.0
    %69 = vmatpush1.msra.mxu0 %v49
    %70 = vmatprep.subr.mxu0 0.0
    %71 = vmatpush1.msra.mxu0 %v50
    %72 = vmatprep.subr.mxu0 0.0
    %73 = vmatpush1.msra.mxu0 %v51
    %74 = vmatprep.subr.mxu0 0.0
    %75 = vmatpush1.msra.mxu0 0.0
    %76 = vmatprep.subr.mxu0 0.0
    %77 = vmatpush1.msra.mxu0 0.0
    %78 = vmatprep.subr.mxu0 0.0
    %79 = vmatpush1.msra.mxu0 0.0
    %80 = vmatprep.subr.mxu0 0.0
    %81 = vmatpush1.msra.mxu0 0.0
    %82 = vmatprep.subr.mxu0 0.0
    %83 = vmatpush1.msra.mxu0 0.0
    %84 = vmatprep.subr.mxu0 0.0
    %85 = vmatpush1.msra.mxu0 0.0
    %86 = vmatprep.subr.mxu0 0.0
    %87 = vmatpush1.msra.mxu0 0.0
    %88 = vmatprep.subr.mxu0 0.0
    %89 = vmatpush1.msra.mxu0 0.0
    %90 = vmatprep.subr.mxu0 0.0
    %91 = vmatpush1.msra.mxu0 0.0
    %92 = vmatprep.subr.mxu0 0.0
    %93 = vmatpush1.msra.mxu0 0.0
    %94 = vmatprep.subr.mxu0 0.0
    %95 = vmatpush1.msra.mxu0 0.0
    %96 = vmatprep.subr.mxu0 0.0
    %97 = vmatpush1.msra.mxu0 0.0
    %98 = vmatprep.subr.mxu0 0.0
    %99 = vmatpush1.msra.mxu0 0.0
    %100 = vmatprep.subr.mxu0 0.0
    %101 = vmatpush1.msra.mxu0 0.0
    %102 = vmatprep.subr.mxu0 0.0
    %103 = vmatpush1.msra.mxu0 0.0
    %104 = vmatprep.subr.mxu0 0.0
    %105 = vmatpush1.msra.mxu0 0.0
    %106 = vmatprep.subr.mxu0 0.0
    %107 = vmatpush1.msra.mxu0 0.0
    %108 = vmatprep.subr.mxu0 0.0
    %109 = vmatpush1.msra.mxu0 0.0
    %110 = vmatprep.subr.mxu0 0.0
    %111 = vmatpush1.msra.mxu0 0.0
    %112 = vmatprep.subr.mxu0 0.0
    %113 = vmatpush1.msra.mxu0 0.0
    %114 = vmatprep.subr.mxu0 0.0
    %115 = vmatpush1.msra.mxu0 0.0
    %116 = vmatprep.subr.mxu0 0.0
    %117 = vmatpush1.msra.mxu0 0.0
    %118 = vmatprep.subr.mxu0 0.0
    %119 = vmatpush1.msra.mxu0 0.0
    %120 = vmatprep.subr.mxu0 0.0
    %121 = vmatpush1.msra.mxu0 0.0
    %122 = vmatprep.subr.mxu0 0.0
    %123 = vmatpush1.msra.mxu0 0.0
    %124 = vmatprep.subr.mxu0 0.0
    %125 = vmatpush1.msra.mxu0 0.0
    %126 = vmatprep.subr.mxu0 0.0
    %127 = vmatpush1.msra.mxu0 0.0
    %128 = vmatprep.subr.mxu0 0.0
    %129 = vmatpush1.msra.mxu0 0.0
    %130 = vmatprep.mubr.f32.mxu0 0.0
    %131 = vmatmul.mubr.f32.gmra.mrb[0].mxu0 %v61
    %v132 = vpop.f32.mrb[0].mxu0
    %v133 = vadd.f32 %v57, %v132
    %v134 = vpop.f32.mrb[0].mxu0
    %135 = vmatprep.mubr.f32.mxu0 0.0
    %136 = vmatmul.mubr.f32.gmra.mrb[0].mxu0 %v64
    %v137 = vpop.f32.mrb[0].mxu0
    %v138 = vadd.f32 %v57, %v137
    %v139 = vpop.f32.mrb[0].mxu0
    %140 = vdwg.mxu0
    %141 = vst [vmem:[#allocation7] sm:$0xff] %v133
    %142 = vst [vmem:[#allocation7 + $0x8] sm:$0xff] %v138
    %143 = vmax.xlane.f32.xlu0 %v133
    %v144 = vpop.xlane.xlu0 %143
    %145 = vmax.xlane.f32.xlu0 %v138
    %v146 = vpop.xlane.xlu0 %145
    %v147 = vsub.f32 %v133, %v144
    %v148 = vsub.f32 %v138, %v146
    %v149 = vmul.f32 %v147, 1.442695
    %v150 = vpow.pop %v149
    %v151 = vmul.f32 %v148, 1.442695
    %v152 = vpow.pop %v151
    %153 = vadd.xlane.f32.xlu0 %v150
    %v154 = vpop.xlane.xlu0 %153
    %155 = vadd.xlane.f32.xlu0 %v152
    %v156 = vpop.xlane.xlu0 %155
    %v157 = vrcp.pop %v154
    %v158 = vrcp.pop %v156
    %v159 = vmul.f32 %v150, %v157
    %v160 = vmul.f32 %v152, %v158
    %161 = vst [vmem:[#allocation8] sm:$0xff] %v159
    %162 = vst [vmem:[#allocation8 + $0x8] sm:$0xff] %v160
    // Predicated region
    $region22: #{tpu_custom_call.1} parent=1 // pred_check
      _
    $region23: #{tpu_custom_call.1} parent=1 // pred_check_branch
      %164 = sbr.rel (0) target = $region25
    $region24: #{tpu_custom_call.1} parent=1 // pred_region
      %s166 = ssub.s32 256, 256
      %167 = vsyncadd [#allocation4], %s166
      %s168 = sshll.u32 [#allocation7], 4
      %s169 = int_to_ptr.vmem [resolvable:$true] %s168
      %174 = dma.vmem_to_hbm [thread:$0]  %s169, 256, %s3, [#allocation4], 128, 128, 8
    $region25: #{tpu_custom_call.1} parent=1 // pred_fallthru
      _
    // Predicated region
    $region26: #{tpu_custom_call.1} parent=1 // pred_check
      _
    $region27: #{tpu_custom_call.1} parent=1 // pred_check_branch
      %176 = sbr.rel (0) target = $region29
    $region28: #{tpu_custom_call.1} parent=1 // pred_region
      %s178 = ssub.s32 256, 256
      %179 = vsyncadd [#allocation9], %s178
      %s180 = sshll.u32 [#allocation8], 4
      %s181 = int_to_ptr.vmem [resolvable:$true] %s180
      %186 = dma.vmem_to_hbm [thread:$0]  %s181, 256, %s4, [#allocation9], 128, 128, 8
    $region29: #{tpu_custom_call.1} parent=1 // pred_fallthru
      _
    // Predicated region
    $region30: #{tpu_custom_call.1} parent=1 // pred_check
      _
    $region31: #{tpu_custom_call.1} parent=1 // pred_check_branch
      %188 = sbr.rel (0) target = $region33
    $region32: #{tpu_custom_call.1} parent=1 // pred_region
      %189 = dma.done [#allocation4], 256
    $region33: #{tpu_custom_call.1} parent=1 // pred_fallthru
      _
    // Predicated region
    $region34: #{tpu_custom_call.1} parent=1 // pred_check
      _
    $region35: #{tpu_custom_call.1} parent=1 // pred_check_branch
      %191 = sbr.rel (0) target = $region37
    $region36: #{tpu_custom_call.1} parent=1 // pred_region
      %192 = dma.done [#allocation9], 256
    $region37: #{tpu_custom_call.1} parent=1 // pred_fallthru
      _
    %193 = vsyncpa [#allocation3], 1
    %194 = vsyncpa [#allocation6], 1
    %195 = vsyncpa [#allocation4], 1
    %196 = vsyncpa [#allocation9], 1

</llo_original>
